<compile_context>
chip_gen: v5e
topology: v5e:2x2
jax: 0.10.0
libtpu: 0.0.40
codegen_flags: <defaults>
</compile_context>

<pallas_src>
import functools

import jax
import jax.numpy as jnp
from jax.experimental import pallas as pl
from jax.experimental.pallas import tpu as pltpu


def _round_up(x, m):
    return ((x + m - 1) // m) * m


def _apply_activation(y, activation_fn):
    if activation_fn == "relu":
        return jnp.maximum(y, 0.0)
    elif activation_fn == "tanh":
        return jnp.tanh(y)
    elif activation_fn == "sigmoid":
        return jax.nn.sigmoid(y)
    elif activation_fn == "leaky_relu":
        # PyTorch nn.LeakyReLU default negative_slope = 0.01
        return jnp.where(y >= 0.0, y, 0.01 * y)
    elif activation_fn == "none":
        return y
    else:
        raise ValueError(f"unknown activation: {activation_fn}")


def _mlp_kernel(*refs, n_layers, activation_fn, output_size,
                want_logits, want_preds, compute_dtype):
    """Fused MLP: x tile -> [Linear+act]*(L-1) -> Linear -> (logits, argmax).

    refs layout: (x_ref, w0, b0, w1, b1, ..., [logits_ref], [preds_ref]).
    Feature dims are pre-padded to multiples of 128 with zero padding on weights, so padded
    hidden columns (even when nonzero after sigmoid/tanh) are annihilated by the next layer's
    zero weight rows.
    """
    x_ref = refs[0]
    param_refs = refs[1:1 + 2 * n_layers]
    out_refs = refs[1 + 2 * n_layers:]

    h = x_ref[...]
    for i in range(n_layers):
        w = param_refs[2 * i][...]              # compute_dtype (bf16) [F_in_pad, F_out_pad]
        b = param_refs[2 * i + 1][...]          # f32 (1, F_out_pad), broadcast once per layer
        y = jnp.dot(h, w, preferred_element_type=jnp.float32) + b
        if i < n_layers - 1:
            # Cast back to the compute dtype so the next matmul runs at native MXU rate.
            h = _apply_activation(y, activation_fn).astype(compute_dtype)
        else:
            h = y                               # f32 logits

    oi = 0
    if want_logits:
        out_refs[oi][...] = h.astype(out_refs[oi].dtype)
        oi += 1
    if want_preds:
        # Fused argmax over the real (unpadded) class axis: row max + first matching index.
        tb, f_pad = h.shape
        col = jax.lax.broadcasted_iota(jnp.int32, (tb, f_pad), 1)
        valid = col < output_size
        masked = jnp.where(valid, h, -jnp.inf)
        row_max = jnp.max(masked, axis=1, keepdims=True)
        idx = jnp.where(valid & (masked == row_max), col, jnp.int32(f_pad))
        # (TB, 1) lane width -> masked store; accepted (payload is tiny vs. relayout cost).
        out_refs[oi][...] = jnp.min(idx, axis=1, keepdims=True).astype(jnp.int32)


@functools.partial(
    jax.jit, static_argnames=("activation_fn", "output_size", "outputs", "tile_b"))
def mlp_forward(x, padded_params, activation_fn, output_size, outputs="both", tile_b=1024):
    """Run the fused MLP kernel.

    x:             [B, F_in] (any float dtype; cast to the params' compute dtype)
    padded_params: list of (w_pad [F_in_pad, F_out_pad] compute_dtype, b_pad [1, F_out_pad] f32)
                   with feature dims padded to multiples of 128 (zero padding).
    outputs:       "both" -> (logits_pad [B_pad, F_last_pad] f32, preds_pad [B_pad, 1] i32)
                   "logits" -> logits_pad only; "preds" -> preds_pad only.
    """
    if outputs not in ("both", "logits", "preds"):
        raise ValueError(f"bad outputs: {outputs}")
    want_logits = outputs in ("both", "logits")
    want_preds = outputs in ("both", "preds")

    B, F_in = x.shape
    n_layers = len(padded_params)
    compute_dtype = padded_params[0][0].dtype
    f0_pad = padded_params[0][0].shape[0]
    f_last_pad = padded_params[-1][0].shape[1]

    # Even-split batch tiling: caps padding waste at <16 rows per tile; TB multiple of 16 for
    # the bf16 (16,128) tile. Keep >= 2 tiles for larger batches so v7x megacore splits work.
    n_tiles = max(1, (B + tile_b - 1) // tile_b)
    if B >= 256:
        n_tiles = max(n_tiles, 2)
    TB = _round_up((B + n_tiles - 1) // n_tiles, 16)
    B_pad = n_tiles * TB

    # Skip the wrapper-side pad entirely when x is already aligned; otherwise fold pad + cast
    # into a single op (one pass over x, not an extra full read+write).
    if B_pad == B and f0_pad == F_in and x.dtype == compute_dtype:
        x_pad = x
    else:
        x_pad = jnp.zeros((B_pad, f0_pad), compute_dtype).at[:B, :F_in].set(
            x.astype(compute_dtype))

    kernel = functools.partial(
        _mlp_kernel,
        n_layers=n_layers,
        activation_fn=activation_fn,
        output_size=output_size,
        want_logits=want_logits,
        want_preds=want_preds,
        compute_dtype=compute_dtype,
    )

    flat_params = [p for wb in padded_params for p in wb]

    in_specs = [pl.BlockSpec((TB, f0_pad), lambda i: (i, 0))]
    for w, b in padded_params:
        # Grid-invariant blocks: single-buffer them (halves resident weight VMEM).
        in_specs.append(pl.BlockSpec(w.shape, lambda i: (0, 0),
                                     pipeline_mode=pl.Buffered(buffer_count=1)))
        in_specs.append(pl.BlockSpec(b.shape, lambda i: (0, 0),
                                     pipeline_mode=pl.Buffered(buffer_count=1)))

    out_shapes = []
    out_specs = []
    if want_logits:
        out_shapes.append(jax.ShapeDtypeStruct((B_pad, f_last_pad), jnp.float32))
        out_specs.append(pl.BlockSpec((TB, f_last_pad), lambda i: (i, 0)))
    if want_preds:
        out_shapes.append(jax.ShapeDtypeStruct((B_pad, 1), jnp.int32))
        out_specs.append(pl.BlockSpec((TB, 1), lambda i: (i, 0)))

    # VMEM budget: single-buffered params + double-buffered x/output tiles + f32 intermediates,
    # 2x headroom, floor 32 MiB, cap 64 MiB (valid on v7x; well under v5e/v6e's 128 MiB).
    itemsize = jnp.dtype(compute_dtype).itemsize
    param_bytes = sum(w.size * w.dtype.itemsize + b.size * b.dtype.itemsize
                      for w, b in padded_params)
    act_bytes = sum(TB * w.shape[1] * 4 for w, _ in padded_params)
    io_bytes = 2 * TB * f0_pad * itemsize
    if want_logits:
        io_bytes += 2 * TB * f_last_pad * 4
    if want_preds:
        io_bytes += 2 * TB * 128 * 4
    vmem_limit = int(min(max(2 * (param_bytes + act_bytes + io_bytes), 32 << 20), 64 << 20))

    results = pl.pallas_call(
        kernel,
        out_shape=tuple(out_shapes),
        grid_spec=pltpu.PrefetchScalarGridSpec(
            num_scalar_prefetch=0,
            grid=(n_tiles,),
            in_specs=in_specs,
            out_specs=tuple(out_specs),
        ),
        compiler_params=pltpu.CompilerParams(
            # Batch axis is fully independent -> megacore split on v7x, harmless elsewhere.
            dimension_semantics=("parallel",),
            vmem_limit_bytes=vmem_limit,
        ),
    )(x_pad, *flat_params)

    if outputs == "both":
        return results[0], results[1]
    return results[0]


def init_params(key, input_size, hidden_size, output_size):
    """Deterministic parameter init matching nn.Linear shapes.

    Weights are stored transposed ([in, out]) relative to PyTorch's [out, in] so the kernel
    computes x @ W directly.
    """
    sizes = [input_size] + list(hidden_size) + [output_size]
    params = []
    for i in range(len(sizes) - 1):
        fan_in, fan_out = sizes[i], sizes[i + 1]
        key, kw, kb = jax.random.split(key, 3)
        bound = 1.0 / (fan_in ** 0.5)
        w = jax.random.uniform(kw, (fan_in, fan_out), jnp.float32, -bound, bound)
        b = jax.random.uniform(kb, (1, fan_out), jnp.float32, -bound, bound)
        params.append((w, b))
    return params


def pad_params(params, compute_dtype=jnp.bfloat16):
    """Zero-pad feature dims to multiples of 128 (done once at init).

    Weights are cast to the compute dtype (bf16 by default) for halved DMA bytes and native
    MXU rate; biases stay f32 (added after the f32 accumulation).
    """
    padded = []
    for w, b in params:
        fi, fo = w.shape
        fi_p, fo_p = _round_up(fi, 128), _round_up(fo, 128)
        w_p = jnp.zeros((fi_p, fo_p), compute_dtype).at[:fi, :fo].set(
            w.astype(compute_dtype))
        b_p = jnp.zeros((1, fo_p), jnp.float32).at[:, :fo].set(b)
        padded.append((w_p, b_p))
    return padded


def neural_network_forward(x, padded_params, activation_fn, output_size):
    """Equivalent of NeuralNetwork.forward (Linear+act per hidden layer, final Linear)."""
    logits_pad = mlp_forward(x, padded_params, activation_fn, output_size, outputs="logits")
    return logits_pad[:x.shape[0], :output_size]


def predict(x, padded_params, activation_fn, output_size):
    """Equivalent of NeuralNetwork.predict: argmax over dim 1, fused in-kernel.

    Uses the preds-only kernel variant: the padded logits are never written back to HBM.
    """
    preds_pad = mlp_forward(x, padded_params, activation_fn, output_size, outputs="preds")
    return preds_pad[:x.shape[0], 0]


if __name__ == "__main__":
    # Small shapes consistent with the module: MLP over flat feature vectors.
    batch = 8
    input_size = 16
    hidden_size = [32, 32]
    output_size = 8
    activation_fn = "relu"

    key = jax.random.PRNGKey(0)
    key, kx = jax.random.split(key)
    x = jax.random.normal(kx, (batch, input_size), jnp.float32)

    params = init_params(key, input_size, hidden_size, output_size)
    padded_params = pad_params(params)       # bf16 weights, f32 biases, 128-padded features

    logits_pad, preds_pad = mlp_forward(x, padded_params, activation_fn, output_size,
                                        outputs="both")
    logits_pad = jax.block_until_ready(logits_pad)
    preds_pad = jax.block_until_ready(preds_pad)
    logits = logits_pad[:batch, :output_size]
    preds = preds_pad[:batch, 0]

    # Pure-JAX f32 reference (kernel matmuls are bf16 -> loose tolerance).
    ref = x
    for i, (w, b) in enumerate(params):
        ref = ref @ w + b
        if i < len(params) - 1:
            ref = jnp.maximum(ref, 0.0)
    assert logits.shape == (batch, output_size)
    assert jnp.allclose(logits, ref, atol=3e-2, rtol=3e-2)

    # Fused argmax must match argmax of the kernel's own logits (first-occurrence ties).
    assert preds.shape == (batch,)
    assert jnp.array_equal(preds, jnp.argmax(logits, axis=1).astype(preds.dtype))

    # predict-only path (no logits writeback) must agree with the fused path.
    preds_only = jax.block_until_ready(
        predict(x, padded_params, activation_fn, output_size))
    assert preds_only.shape == (batch,)
    assert jnp.array_equal(preds_only, preds)

    print("KERNEL_OK")
</pallas_src>

<mosaic_0001>
module attributes {stable_mosaic.version = 11 : i64} {
  func.func @_mlp_kernel(%arg0: i32, %arg1: memref<16x128xbf16, #tpu.memory_space<vmem>>, %arg2: memref<128x128xbf16, #tpu.memory_space<vmem>>, %arg3: memref<1x128xf32, #tpu.memory_space<vmem>>, %arg4: memref<128x128xbf16, #tpu.memory_space<vmem>>, %arg5: memref<1x128xf32, #tpu.memory_space<vmem>>, %arg6: memref<128x128xbf16, #tpu.memory_space<vmem>>, %arg7: memref<1x128xf32, #tpu.memory_space<vmem>>, %arg8: memref<16x128xf32, #tpu.memory_space<vmem>>, %arg9: memref<16x1xi32, #tpu.memory_space<vmem>>) attributes {dimension_semantics = [#tpu.dimension_semantics<parallel>], iteration_bounds = array<i64: 1>, scalar_prefetch = 0 : i64, scratch_operands = 0 : i64, tpu.core_type = #tpu.core_type<tc>, window_params = [{transform_indices = @transform_0, window_bounds = array<i64: 16, 128>}, {pipeline_mode = #tpu.pipeline_mode<synchronous>, transform_indices = @transform_1, window_bounds = array<i64: 128, 128>}, {pipeline_mode = #tpu.pipeline_mode<synchronous>, transform_indices = @transform_2, window_bounds = array<i64: 1, 128>}, {pipeline_mode = #tpu.pipeline_mode<synchronous>, transform_indices = @transform_3, window_bounds = array<i64: 128, 128>}, {pipeline_mode = #tpu.pipeline_mode<synchronous>, transform_indices = @transform_4, window_bounds = array<i64: 1, 128>}, {pipeline_mode = #tpu.pipeline_mode<synchronous>, transform_indices = @transform_5, window_bounds = array<i64: 128, 128>}, {pipeline_mode = #tpu.pipeline_mode<synchronous>, transform_indices = @transform_6, window_bounds = array<i64: 1, 128>}, {transform_indices = @transform_7, window_bounds = array<i64: 16, 128>}, {transform_indices = @transform_8, window_bounds = array<i64: 16, 1>}]} {
    %c0 = arith.constant 0 : index
    %c0_0 = arith.constant 0 : index
    %0 = vector.load %arg1[%c0, %c0_0] : memref<16x128xbf16, #tpu.memory_space<vmem>>, vector<16x128xbf16>
    %c0_1 = arith.constant 0 : index
    %c0_2 = arith.constant 0 : index
    %1 = vector.load %arg2[%c0_1, %c0_2] : memref<128x128xbf16, #tpu.memory_space<vmem>>, vector<128x128xbf16>
    %c0_3 = arith.constant 0 : index
    %c0_4 = arith.constant 0 : index
    %2 = vector.load %arg3[%c0_3, %c0_4] : memref<1x128xf32, #tpu.memory_space<vmem>>, vector<1x128xf32>
    %cst = arith.constant dense<0.000000e+00> : vector<16x128xf32>
    %3 = tpu.matmul %0, %1, %cst {dimension_numbers = #tpu.dot_dimension_numbers<[1], [0], [0], [1], [0, 0, 1, 1], [], []>} : vector<16x128xbf16>, vector<128x128xbf16>, vector<16x128xf32> -> vector<16x128xf32>
    %4 = vector.broadcast %2 : vector<1x128xf32> to vector<16x128xf32>
    %5 = arith.addf %3, %4 : vector<16x128xf32>
    %cst_5 = arith.constant 0.000000e+00 : f32
    %6 = vector.broadcast %cst_5 : f32 to vector<16x128xf32>
    %7 = arith.maximumf %5, %6 : vector<16x128xf32>
    %8 = arith.truncf %7 : vector<16x128xf32> to vector<16x128xbf16>
    %c0_6 = arith.constant 0 : index
    %c0_7 = arith.constant 0 : index
    %9 = vector.load %arg4[%c0_6, %c0_7] : memref<128x128xbf16, #tpu.memory_space<vmem>>, vector<128x128xbf16>
    %c0_8 = arith.constant 0 : index
    %c0_9 = arith.constant 0 : index
    %10 = vector.load %arg5[%c0_8, %c0_9] : memref<1x128xf32, #tpu.memory_space<vmem>>, vector<1x128xf32>
    %cst_10 = arith.constant dense<0.000000e+00> : vector<16x128xf32>
    %11 = tpu.matmul %8, %9, %cst_10 {dimension_numbers = #tpu.dot_dimension_numbers<[1], [0], [0], [1], [0, 0, 1, 1], [], []>} : vector<16x128xbf16>, vector<128x128xbf16>, vector<16x128xf32> -> vector<16x128xf32>
    %12 = vector.broadcast %10 : vector<1x128xf32> to vector<16x128xf32>
    %13 = arith.addf %11, %12 : vector<16x128xf32>
    %cst_11 = arith.constant 0.000000e+00 : f32
    %14 = vector.broadcast %cst_11 : f32 to vector<16x128xf32>
    %15 = arith.maximumf %13, %14 : vector<16x128xf32>
    %16 = arith.truncf %15 : vector<16x128xf32> to vector<16x128xbf16>
    %c0_12 = arith.constant 0 : index
    %c0_13 = arith.constant 0 : index
    %17 = vector.load %arg6[%c0_12, %c0_13] : memref<128x128xbf16, #tpu.memory_space<vmem>>, vector<128x128xbf16>
    %c0_14 = arith.constant 0 : index
    %c0_15 = arith.constant 0 : index
    %18 = vector.load %arg7[%c0_14, %c0_15] : memref<1x128xf32, #tpu.memory_space<vmem>>, vector<1x128xf32>
    %cst_16 = arith.constant dense<0.000000e+00> : vector<16x128xf32>
    %19 = tpu.matmul %16, %17, %cst_16 {dimension_numbers = #tpu.dot_dimension_numbers<[1], [0], [0], [1], [0, 0, 1, 1], [], []>} : vector<16x128xbf16>, vector<128x128xbf16>, vector<16x128xf32> -> vector<16x128xf32>
    %20 = vector.broadcast %18 : vector<1x128xf32> to vector<16x128xf32>
    %21 = arith.addf %19, %20 : vector<16x128xf32>
    %c0_17 = arith.constant 0 : index
    %c0_18 = arith.constant 0 : index
    %22 = vector.load %arg8[%c0_17, %c0_18] : memref<16x128xf32, #tpu.memory_space<vmem>>, vector<16x128xf32>
    tpu.vector_store %arg8[%c0_17, %c0_18], %21 {strides = array<i32>} : memref<16x128xf32, #tpu.memory_space<vmem>>, vector<16x128xf32>,
    %23 = tpu.iota {dimensions = array<i32: 1>} : vector<16x128xi32>
    %c8_i32 = arith.constant 8 : i32
    %24 = vector.broadcast %c8_i32 : i32 to vector<16x128xi32>
    %25 = arith.cmpi slt, %23, %24 : vector<16x128xi32>
    %cst_19 = arith.constant 0xFF800000 : f32
    %26 = vector.broadcast %cst_19 : f32 to vector<16x128xf32>
    %27 = arith.select %25, %21, %26 : vector<16x128xi1>, vector<16x128xf32>
    %cst_20 = arith.constant dense<0xFF800000> : vector<16xf32>
    %28 = vector.multi_reduction <maximumf>, %27, %cst_20 [1] : vector<16x128xf32> to vector<16xf32>
    %29 = vector.shape_cast %28 : vector<16xf32> to vector<16x1xf32>
    %30 = vector.broadcast %29 : vector<16x1xf32> to vector<16x128xf32>
    %31 = arith.cmpf oeq, %27, %30 : vector<16x128xf32>
    %32 = arith.andi %25, %31 : vector<16x128xi1>
    %c128_i32 = arith.constant 128 : i32
    %33 = vector.broadcast %c128_i32 : i32 to vector<16x128xi32>
    %34 = arith.select %32, %23, %33 : vector<16x128xi1>, vector<16x128xi32>
    %cst_21 = arith.constant dense<2147483647> : vector<16xi32>
    %35 = vector.multi_reduction <minsi>, %34, %cst_21 [1] : vector<16x128xi32> to vector<16xi32>
    %36 = vector.shape_cast %35 : vector<16xi32> to vector<16x1xi32>
    %c0_22 = arith.constant 0 : index
    %c0_23 = arith.constant 0 : index
    %37 = vector.load %arg9[%c0_22, %c0_23] : memref<16x1xi32, #tpu.memory_space<vmem>>, vector<16x1xi32>
    tpu.vector_store %arg9[%c0_22, %c0_23], %36 {strides = array<i32>} : memref<16x1xi32, #tpu.memory_space<vmem>>, vector<16x1xi32>,
    return
  }
  func.func @transform_0(%arg0: i32) -> (i32, i32) {
    %c0_i32 = arith.constant 0 : i32
    %c0_i32_0 = arith.constant 0 : i32
    return %arg0, %c0_i32 : i32, i32
  }
  func.func @transform_1(%arg0: i32) -> (i32, i32) {
    %c0_i32 = arith.constant 0 : i32
    %c0_i32_0 = arith.constant 0 : i32
    %c0_i32_1 = arith.constant 0 : i32
    return %c0_i32, %c0_i32_0 : i32, i32
  }
  func.func @transform_2(%arg0: i32) -> (i32, i32) {
    %c0_i32 = arith.constant 0 : i32
    %c0_i32_0 = arith.constant 0 : i32
    %c0_i32_1 = arith.constant 0 : i32
    return %c0_i32, %c0_i32_0 : i32, i32
  }
  func.func @transform_3(%arg0: i32) -> (i32, i32) {
    %c0_i32 = arith.constant 0 : i32
    %c0_i32_0 = arith.constant 0 : i32
    %c0_i32_1 = arith.constant 0 : i32
    return %c0_i32, %c0_i32_0 : i32, i32
  }
  func.func @transform_4(%arg0: i32) -> (i32, i32) {
    %c0_i32 = arith.constant 0 : i32
    %c0_i32_0 = arith.constant 0 : i32
    %c0_i32_1 = arith.constant 0 : i32
    return %c0_i32, %c0_i32_0 : i32, i32
  }
  func.func @transform_5(%arg0: i32) -> (i32, i32) {
    %c0_i32 = arith.constant 0 : i32
    %c0_i32_0 = arith.constant 0 : i32
    %c0_i32_1 = arith.constant 0 : i32
    return %c0_i32, %c0_i32_0 : i32, i32
  }
  func.func @transform_6(%arg0: i32) -> (i32, i32) {
    %c0_i32 = arith.constant 0 : i32
    %c0_i32_0 = arith.constant 0 : i32
    %c0_i32_1 = arith.constant 0 : i32
    return %c0_i32, %c0_i32_0 : i32, i32
  }
  func.func @transform_7(%arg0: i32) -> (i32, i32) {
    %c0_i32 = arith.constant 0 : i32
    %c0_i32_0 = arith.constant 0 : i32
    return %arg0, %c0_i32 : i32, i32
  }
  func.func @transform_8(%arg0: i32) -> (i32, i32) {
    %c0_i32 = arith.constant 0 : i32
    %c0_i32_0 = arith.constant 0 : i32
    return %arg0, %c0_i32 : i32, i32
  }
}

</mosaic_0001>

<llo_original>
// kernel: mlp_forward.1
$region0: #{mlp_forward.1}
  #allocation0 [shape = 'u32[]', space=smem, size = 0x4, offset = 0x4, fixed_abs, tag = 'smem constant byte address 0x4 - core index']
  #allocation1 [shape = 'u32[72,128]{1,0:T(1,128)}', space=vmem, size = 0x9000, scoped, tag = 'internal scratch']
  %s0 = inlined_call_operand.vmem [shape: bf16[16,128], index: 0, kind: input, shape index: {}]
  %s1 = inlined_call_operand.hbm [shape: bf16[128,128], index: 1, kind: input, shape index: {}]
  %s2 = inlined_call_operand.vmem [shape: f32[1,128], index: 2, kind: input, shape index: {}]
  %s3 = inlined_call_operand.hbm [shape: bf16[128,128], index: 3, kind: input, shape index: {}]
  %s4 = inlined_call_operand.vmem [shape: f32[1,128], index: 4, kind: input, shape index: {}]
  %s5 = inlined_call_operand.hbm [shape: bf16[128,128], index: 5, kind: input, shape index: {}]
  %s6 = inlined_call_operand.vmem [shape: f32[1,128], index: 6, kind: input, shape index: {}]
  %s7 = inlined_call_operand.hbm [shape: f32[16,128], index: 7, kind: output, shape index: {0}]
  %s8 = inlined_call_operand.vmem [shape: s32[16,1], index: 8, kind: output, shape index: {1}]
  %9 = xla_tuple %s7, %s8
  %s10 = sld [smem:[#allocation0]]
  $region58: #{mlp_forward.1} parent=0
    _
  %s12 = ssub.s32 1, %s10
  %s13 = scalar_select 0, %s12, %s10
  $region1: #{mlp_forward.1} parent=0
    #allocation2 [shape = 'u8[32768]{0}', space=vmem, size = 0x8000, scoped, tag = 'input window, operand 1, single buffered']
    #allocation3 [shape = 's32[1]{0}', space=sflag, size = 0x4, scoped, tag = 'scoped memory for mlp_forward.1']
    #allocation4 [shape = 's32[1]{0}', space=sflag, size = 0x4, scoped, tag = 'scoped memory for mlp_forward.1']
    #allocation5 [shape = 'u8[32768]{0}', space=vmem, size = 0x8000, scoped, tag = 'input window, operand 3, single buffered']
    #allocation6 [shape = 's32[1]{0}', space=sflag, size = 0x4, scoped, tag = 'scoped memory for mlp_forward.1']
    #allocation7 [shape = 'u8[32768]{0}', space=vmem, size = 0x8000, scoped, tag = 'input window, operand 5, single buffered']
    #allocation8 [shape = 'u8[8192]{0}', space=vmem, size = 0x2000, scoped, tag = 'output window, operand 0, single buffered']
    %14 = vsyncpa [#allocation3], 0
    %15 = vsyncpa [#allocation6], 0
    %16 = vsyncpa [#allocation4], 0
    // Predicated region
    $region2: #{mlp_forward.1} parent=1 // pred_check
      _
    $region3: #{mlp_forward.1} parent=1 // pred_check_branch
      %18 = sbr.rel (0) target = $region5
    $region4: #{mlp_forward.1} parent=1 // pred_region
      _
    $region5: #{mlp_forward.1} parent=1 // pred_fallthru
      _
    // Predicated region
    $region6: #{mlp_forward.1} parent=1 // pred_check
      _
    $region7: #{mlp_forward.1} parent=1 // pred_check_branch
      %20 = sbr.rel (0) target = $region9
    $region8: #{mlp_forward.1} parent=1 // pred_region
      %22 = vsyncadd [#allocation3], 0
      %s23 = sshll.u32 %s1, 4
      %s24 = int_to_ptr.hbm [resolvable:$true] %s23
      %s25 = sshll.u32 [#allocation2], 4
      %s26 = int_to_ptr.vmem [resolvable:$true] %s25
      %31 = dma.hbm_to_vmem [thread:$0]  %s24, 1024, %s26, [#allocation3], 64, 64, 4
    $region9: #{mlp_forward.1} parent=1 // pred_fallthru
      _
    // Predicated region
    $region10: #{mlp_forward.1} parent=1 // pred_check
      _
    $region11: #{mlp_forward.1} parent=1 // pred_check_branch
      %33 = sbr.rel (0) target = $region13
    $region12: #{mlp_forward.1} parent=1 // pred_region
      _
    $region13: #{mlp_forward.1} parent=1 // pred_fallthru
      _
    // Predicated region
    $region14: #{mlp_forward.1} parent=1 // pred_check
      _
    $region15: #{mlp_forward.1} parent=1 // pred_check_branch
      %35 = sbr.rel (0) target = $region17
    $region16: #{mlp_forward.1} parent=1 // pred_region
      %37 = vsyncadd [#allocation6], 0
      %s38 = sshll.u32 %s3, 4
      %s39 = int_to_ptr.hbm [resolvable:$true] %s38
      %s40 = sshll.u32 [#allocation5], 4
      %s41 = int_to_ptr.vmem [resolvable:$true] %s40
      %46 = dma.hbm_to_vmem [thread:$0]  %s39, 1024, %s41, [#allocation6], 64, 64, 4
    $region17: #{mlp_forward.1} parent=1 // pred_fallthru
      _
    // Predicated region
    $region18: #{mlp_forward.1} parent=1 // pred_check
      _
    $region19: #{mlp_forward.1} parent=1 // pred_check_branch
      %48 = sbr.rel (0) target = $region21
    $region20: #{mlp_forward.1} parent=1 // pred_region
      _
    $region21: #{mlp_forward.1} parent=1 // pred_fallthru
      _
    // Predicated region
    $region22: #{mlp_forward.1} parent=1 // pred_check
      _
    $region23: #{mlp_forward.1} parent=1 // pred_check_branch
      %50 = sbr.rel (0) target = $region25
    $region24: #{mlp_forward.1} parent=1 // pred_region
      %52 = vsyncadd [#allocation6], 0
      %s53 = sshll.u32 %s5, 4
      %s54 = int_to_ptr.hbm [resolvable:$true] %s53
      %s55 = sshll.u32 [#allocation7], 4
      %s56 = int_to_ptr.vmem [resolvable:$true] %s55
      %61 = dma.hbm_to_vmem [thread:$0]  %s54, 1024, %s56, [#allocation6], 64, 64, 4
    $region25: #{mlp_forward.1} parent=1 // pred_fallthru
      _
    // Predicated region
    $region26: #{mlp_forward.1} parent=1 // pred_check
      _
    $region27: #{mlp_forward.1} parent=1 // pred_check_branch
      %63 = sbr.rel (0) target = $region29
    $region28: #{mlp_forward.1} parent=1 // pred_region
      _
    $region29: #{mlp_forward.1} parent=1 // pred_fallthru
      _
    // Predicated region
    $region30: #{mlp_forward.1} parent=1 // pred_check
      _
    $region31: #{mlp_forward.1} parent=1 // pred_check_branch
      %65 = sbr.rel (0) target = $region33
    $region32: #{mlp_forward.1} parent=1 // pred_region
      %67 = dma.done [#allocation3], 1024
    $region33: #{mlp_forward.1} parent=1 // pred_fallthru
      _
    // Predicated region
    $region34: #{mlp_forward.1} parent=1 // pred_check
      _
    $region35: #{mlp_forward.1} parent=1 // pred_check_branch
      %69 = sbr.rel (0) target = $region37
    $region36: #{mlp_forward.1} parent=1 // pred_region
      %71 = dma.done [#allocation6], 1024
    $region37: #{mlp_forward.1} parent=1 // pred_fallthru
      _
    // Predicated region
    $region38: #{mlp_forward.1} parent=1 // pred_check
      _
    $region39: #{mlp_forward.1} parent=1 // pred_check_branch
      %73 = sbr.rel (0) target = $region41
    $region40: #{mlp_forward.1} parent=1 // pred_region
      %75 = dma.done [#allocation6], 1024
    $region41: #{mlp_forward.1} parent=1 // pred_fallthru
      _
    %v76 = vld [vmem:[%s0] sm:$0xf]
    %v77 = vld [vmem:[%s0 + $0x4] sm:$0xf]
    %v78 = vld [vmem:[#allocation2] sm:$0xf]
    %v79 = vld [vmem:[#allocation2 + $0x4] sm:$0xf]
    %v80 = vld [vmem:[#allocation2 + $0x8] sm:$0xf]
    %v81 = vld [vmem:[#allocation2 + $0xc] sm:$0xf]
    %v82 = vld [vmem:[#allocation2 + $0x10] sm:$0xf]
    %v83 = vld [vmem:[#allocation2 + $0x14] sm:$0xf]
    %v84 = vld [vmem:[#allocation2 + $0x18] sm:$0xf]
    %v85 = vld [vmem:[#allocation2 + $0x1c] sm:$0xf]
    %v86 = vld [vmem:[#allocation2 + $0x20] sm:$0xf]
    %v87 = vld [vmem:[#allocation2 + $0x24] sm:$0xf]
    %v88 = vld [vmem:[#allocation2 + $0x28] sm:$0xf]
    %v89 = vld [vmem:[#allocation2 + $0x2c] sm:$0xf]
    %v90 = vld [vmem:[#allocation2 + $0x30] sm:$0xf]
    %v91 = vld [vmem:[#allocation2 + $0x34] sm:$0xf]
    %v92 = vld [vmem:[#allocation2 + $0x38] sm:$0xf]
    %v93 = vld [vmem:[#allocation2 + $0x3c] sm:$0xf]
    %v94 = vld [vmem:[%s2] sm:$0x1]
    %v96 = vperm.slane %v94, 0
    %v100 = vunpack.c.l.b16 %v76
    %v101 = vunpack.c.l.b16 %v77
    %v102 = vpack.c.b16 %v101, %v100
    %v120 = vunpack.c.l.b16 %v78
    %v121 = vunpack.c.l.b16 %v79
    %v122 = vunpack.c.l.b16 %v80
    %v123 = vunpack.c.l.b16 %v81
    %v124 = vunpack.c.l.b16 %v82
    %v125 = vunpack.c.l.b16 %v83
    %v126 = vunpack.c.l.b16 %v84
    %v127 = vunpack.c.l.b16 %v85
    %v128 = vunpack.c.l.b16 %v86
    %v129 = vunpack.c.l.b16 %v87
    %v130 = vunpack.c.l.b16 %v88
    %v131 = vunpack.c.l.b16 %v89
    %v132 = vunpack.c.l.b16 %v90
    %v133 = vunpack.c.l.b16 %v91
    %v134 = vunpack.c.l.b16 %v92
    %v135 = vunpack.c.l.b16 %v93
    %v136 = vpack.c.b16 %v121, %v120
    %v137 = vpack.c.b16 %v123, %v122
    %v138 = vpack.c.b16 %v125, %v124
    %v139 = vpack.c.b16 %v127, %v126
    %v140 = vpack.c.b16 %v129, %v128
    %v141 = vpack.c.b16 %v131, %v130
    %v142 = vpack.c.b16 %v133, %v132
    %v143 = vpack.c.b16 %v135, %v134
    %152 = vmatpush.bf16.msra.mxu0 %v143
    %153 = vmatpush.bf16.msra.mxu0 %v142
    %154 = vmatpush.bf16.msra.mxu0 %v141
    %155 = vmatpush.bf16.msra.mxu0 %v140
    %156 = vmatpush.bf16.msra.mxu0 %v139
    %157 = vmatpush.bf16.msra.mxu0 %v138
    %158 = vmatpush.bf16.msra.mxu0 %v137
    %159 = vmatpush.bf16.msra.mxu0 %v136
    %160 = vmatmul.bf16.gmra.mxu0 %v102
    %v161 = vpop.f32.mrf.mxu0
    %v162 = vadd.f32 %v96, %v161
    %v163 = vpop.f32.mrf.mxu0
    %v164 = vadd.f32 %v96, %v163
    %165 = vdwg.mxu0
    %v166 = vmax.f32 %v162, 0.0
    %v167 = vmax.f32 %v164, 0.0
    %v168 = vpack.c.bf16 %v167, %v166
    %v169 = vld [vmem:[#allocation5] sm:$0xf]
    %v170 = vld [vmem:[#allocation5 + $0x4] sm:$0xf]
    %v171 = vld [vmem:[#allocation5 + $0x8] sm:$0xf]
    %v172 = vld [vmem:[#allocation5 + $0xc] sm:$0xf]
    %v173 = vld [vmem:[#allocation5 + $0x10] sm:$0xf]
    %v174 = vld [vmem:[#allocation5 + $0x14] sm:$0xf]
    %v175 = vld [vmem:[#allocation5 + $0x18] sm:$0xf]
    %v176 = vld [vmem:[#allocation5 + $0x1c] sm:$0xf]
    %v177 = vld [vmem:[#allocation5 + $0x20] sm:$0xf]
    %v178 = vld [vmem:[#allocation5 + $0x24] sm:$0xf]
    %v179 = vld [vmem:[#allocation5 + $0x28] sm:$0xf]
    %v180 = vld [vmem:[#allocation5 + $0x2c] sm:$0xf]
    %v181 = vld [vmem:[#allocation5 + $0x30] sm:$0xf]
    %v182 = vld [vmem:[#allocation5 + $0x34] sm:$0xf]
    %v183 = vld [vmem:[#allocation5 + $0x38] sm:$0xf]
    %v184 = vld [vmem:[#allocation5 + $0x3c] sm:$0xf]
    %v185 = vld [vmem:[%s4] sm:$0x1]
    %v187 = vperm.slane %v185, 0
    %v205 = vunpack.c.l.b16 %v169
    %v206 = vunpack.c.l.b16 %v170
    %v207 = vunpack.c.l.b16 %v171
    %v208 = vunpack.c.l.b16 %v172
    %v209 = vunpack.c.l.b16 %v173
    %v210 = vunpack.c.l.b16 %v174
    %v211 = vunpack.c.l.b16 %v175
    %v212 = vunpack.c.l.b16 %v176
    %v213 = vunpack.c.l.b16 %v177
    %v214 = vunpack.c.l.b16 %v178
    %v215 = vunpack.c.l.b16 %v179
    %v216 = vunpack.c.l.b16 %v180
    %v217 = vunpack.c.l.b16 %v181
    %v218 = vunpack.c.l.b16 %v182
    %v219 = vunpack.c.l.b16 %v183
    %v220 = vunpack.c.l.b16 %v184
    %v221 = vpack.c.b16 %v206, %v205
    %v222 = vpack.c.b16 %v208, %v207
    %v223 = vpack.c.b16 %v210, %v209
    %v224 = vpack.c.b16 %v212, %v211
    %v225 = vpack.c.b16 %v214, %v213
    %v226 = vpack.c.b16 %v216, %v215
    %v227 = vpack.c.b16 %v218, %v217
    %v228 = vpack.c.b16 %v220, %v219
    %237 = vmatpush.bf16.msra.mxu0 %v228
    %238 = vmatpush.bf16.msra.mxu0 %v227
    %239 = vmatpush.bf16.msra.mxu0 %v226
    %240 = vmatpush.bf16.msra.mxu0 %v225
    %241 = vmatpush.bf16.msra.mxu0 %v224
    %242 = vmatpush.bf16.msra.mxu0 %v223
    %243 = vmatpush.bf16.msra.mxu0 %v222
    %244 = vmatpush.bf16.msra.mxu0 %v221
    %245 = vmatmul.bf16.gmra.mxu0 %v168
    %v246 = vpop.f32.mrf.mxu0
    %v247 = vadd.f32 %v187, %v246
    %v248 = vpop.f32.mrf.mxu0
    %v249 = vadd.f32 %v187, %v248
    %250 = vdwg.mxu0
    %v251 = vmax.f32 %v247, 0.0
    %v252 = vmax.f32 %v249, 0.0
    %v253 = vpack.c.bf16 %v252, %v251
    %v254 = vld [vmem:[#allocation7] sm:$0xf]
    %v255 = vld [vmem:[#allocation7 + $0x4] sm:$0xf]
    %v256 = vld [vmem:[#allocation7 + $0x8] sm:$0xf]
    %v257 = vld [vmem:[#allocation7 + $0xc] sm:$0xf]
    %v258 = vld [vmem:[#allocation7 + $0x10] sm:$0xf]
    %v259 = vld [vmem:[#allocation7 + $0x14] sm:$0xf]
    %v260 = vld [vmem:[#allocation7 + $0x18] sm:$0xf]
    %v261 = vld [vmem:[#allocation7 + $0x1c] sm:$0xf]
    %v262 = vld [vmem:[#allocation7 + $0x20] sm:$0xf]
    %v263 = vld [vmem:[#allocation7 + $0x24] sm:$0xf]
    %v264 = vld [vmem:[#allocation7 + $0x28] sm:$0xf]
    %v265 = vld [vmem:[#allocation7 + $0x2c] sm:$0xf]
    %v266 = vld [vmem:[#allocation7 + $0x30] sm:$0xf]
    %v267 = vld [vmem:[#allocation7 + $0x34] sm:$0xf]
    %v268 = vld [vmem:[#allocation7 + $0x38] sm:$0xf]
    %v269 = vld [vmem:[#allocation7 + $0x3c] sm:$0xf]
    %v270 = vld [vmem:[%s6] sm:$0x1]
    %v272 = vperm.slane %v270, 0
    %v290 = vunpack.c.l.b16 %v254
    %v291 = vunpack.c.l.b16 %v255
    %v292 = vunpack.c.l.b16 %v256
    %v293 = vunpack.c.l.b16 %v257
    %v294 = vunpack.c.l.b16 %v258
    %v295 = vunpack.c.l.b16 %v259
    %v296 = vunpack.c.l.b16 %v260
    %v297 = vunpack.c.l.b16 %v261
    %v298 = vunpack.c.l.b16 %v262
    %v299 = vunpack.c.l.b16 %v263
    %v300 = vunpack.c.l.b16 %v264
    %v301 = vunpack.c.l.b16 %v265
    %v302 = vunpack.c.l.b16 %v266
    %v303 = vunpack.c.l.b16 %v267
    %v304 = vunpack.c.l.b16 %v268
    %v305 = vunpack.c.l.b16 %v269
    %v306 = vpack.c.b16 %v291, %v290
    %v307 = vpack.c.b16 %v293, %v292
    %v308 = vpack.c.b16 %v295, %v294
    %v309 = vpack.c.b16 %v297, %v296
    %v310 = vpack.c.b16 %v299, %v298
    %v311 = vpack.c.b16 %v301, %v300
    %v312 = vpack.c.b16 %v303, %v302
    %v313 = vpack.c.b16 %v305, %v304
    %322 = vmatpush.bf16.msra.mxu0 %v313
    %323 = vmatpush.bf16.msra.mxu0 %v312
    %324 = vmatpush.bf16.msra.mxu0 %v311
    %325 = vmatpush.bf16.msra.mxu0 %v310
    %326 = vmatpush.bf16.msra.mxu0 %v309
    %327 = vmatpush.bf16.msra.mxu0 %v308
    %328 = vmatpush.bf16.msra.mxu0 %v307
    %329 = vmatpush.bf16.msra.mxu0 %v306
    %330 = vmatmul.bf16.gmra.mxu0 %v253
    %v331 = vpop.f32.mrf.mxu0
    %v332 = vadd.f32 %v272, %v331
    %v333 = vpop.f32.mrf.mxu0
    %v334 = vadd.f32 %v272, %v333
    %335 = vdwg.mxu0
    %336 = vst [vmem:[#allocation8] sm:$0xff] %v332
    %337 = vst [vmem:[#allocation8 + $0x8] sm:$0xff] %v334
    %v338 = vlaneseq
    %v339 = vand.u32 %v338, 127
    %vm340 = vcmp.lt.s32.totalorder %v339, 8
    %v341 = vsel %vm340, %v332, -inf
    %v342 = vsel %vm340, %v334, -inf
    %343 = vmax.xlane.f32.xlu0 %v341
    %v344 = vpop.xlane.xlu0 %343
    %345 = vmax.xlane.f32.xlu0 %v342
    %v346 = vpop.xlane.xlu0 %345
    %vm347 = vcmp.eq.f32.partialorder %v341, %v344
    %vm348 = vcmp.eq.f32.partialorder %v342, %v346
    %vm349 = vmand %vm340, %vm347
    %vm350 = vmand %vm340, %vm348
    %v351 = vsel %vm349, %v339, 128
    %v352 = vsel %vm350, %v339, 128
    %v353 = vand.u32 %v351, 65535
    %v354 = vshra.s32 %v351, 16
    %v355 = vcvt.s32.f32 %v353
    %v356 = vcvt.s32.f32 %v354
    %357 = vmin.xlane.f32.xlu0 %v356
    %v358 = vpop.xlane.xlu0 %357
    %vm359 = vcmp.eq.f32.partialorder %v356, %v358
    %v360 = vsel %vm359, %v355, inf
    %361 = vmin.xlane.f32.xlu0 %v360
    %v362 = vpop.xlane.xlu0 %361
    %v363 = vcvt.f32.s32 %v362
    %v364 = vcvt.f32.s32 %v358
    %v365 = vshll.u32 %v364, 16
    %v366 = vadd.s32 %v365, %v363
    %v367 = vand.u32 %v352, 65535
    %v368 = vshra.s32 %v352, 16
    %v369 = vcvt.s32.f32 %v367
    %v370 = vcvt.s32.f32 %v368
    %371 = vmin.xlane.f32.xlu0 %v370
    %v372 = vpop.xlane.xlu0 %371
    %vm373 = vcmp.eq.f32.partialorder %v370, %v372
    %v374 = vsel %vm373, %v369, inf
    %375 = vmin.xlane.f32.xlu0 %v374
    %v376 = vpop.xlane.xlu0 %375
    %v377 = vcvt.f32.s32 %v376
    %v378 = vcvt.f32.s32 %v372
    %v379 = vshll.u32 %v378, 16
    %v380 = vadd.s32 %v379, %v377
    %vm381 = vcmask 7168
    %382 = vst.msk [vmem:[%s8] sm:$0xff] %vm381, %v366
    %383 = vst.msk [vmem:[%s8 + $0x8] sm:$0xff] %vm381, %v380
    // Predicated region
    $region42: #{mlp_forward.1} parent=1 // pred_check
      _
    $region43: #{mlp_forward.1} parent=1 // pred_check_branch
      %385 = sbr.rel (0) target = $region45
    $region44: #{mlp_forward.1} parent=1 // pred_region
      %387 = vsyncadd [#allocation4], 0
      %s388 = sshll.u32 [#allocation8], 4
      %s389 = int_to_ptr.vmem [resolvable:$true] %s388
      %s390 = sshll.u32 %s7, 4
      %s391 = int_to_ptr.hbm [resolvable:$true] %s390
      %396 = dma.vmem_to_hbm [thread:$0]  %s389, 256, %s391, [#allocation4], 128, 128, 8
    $region45: #{mlp_forward.1} parent=1 // pred_fallthru
      _
    // Predicated region
    $region46: #{mlp_forward.1} parent=1 // pred_check
      _
    $region47: #{mlp_forward.1} parent=1 // pred_check_branch
      %398 = sbr.rel (0) target = $region49
    $region48: #{mlp_forward.1} parent=1 // pred_region
      _
    $region49: #{mlp_forward.1} parent=1 // pred_fallthru
      _
    // Predicated region
    $region50: #{mlp_forward.1} parent=1 // pred_check
      _
    $region51: #{mlp_forward.1} parent=1 // pred_check_branch
      %400 = sbr.rel (0) target = $region53
    $region52: #{mlp_forward.1} parent=1 // pred_region
      %402 = dma.done [#allocation4], 256
    $region53: #{mlp_forward.1} parent=1 // pred_fallthru
      _
    // Predicated region
    $region54: #{mlp_forward.1} parent=1 // pred_check
      _
    $region55: #{mlp_forward.1} parent=1 // pred_check_branch
      %404 = sbr.rel (0) target = $region57
    $region56: #{mlp_forward.1} parent=1 // pred_region
      _
    $region57: #{mlp_forward.1} parent=1 // pred_fallthru
      _
    %405 = vsyncpa [#allocation3], 1
    %406 = vsyncpa [#allocation6], 1
    %407 = vsyncpa [#allocation4], 1

</llo_original>
